<compile_context>
chip_gen: v7x
topology: tpu7x:2x2x1
jax: 0.10.0
libtpu: 0.0.40
codegen_flags: <defaults>
</compile_context>

<pallas_src>
import functools

import jax
import jax.numpy as jnp
from jax import lax
from jax.experimental import pallas as pl
from jax.experimental.pallas import tpu as pltpu

EPS = 1e-12  # 艾普西龙


def _embed_ln_kernel(tok_smem,            # (N,)  int32 token ids, SMEM (scalar prefetch)
                     seg_ref,             # (TS, 1) int32 segment-id tile (VMEM)
                     word_hbm,            # (V, H) word table, left in HBM (pl.ANY)
                     pos_ref,             # (PB, H) f32 resident position rows
                     st_ref,              # (T, H) f32 resident segment table
                     g_ref, b_ref,        # (1, H) f32 LayerNorm weight / bias
                     o_ref,               # (TS, H) f32 output tile
                     rows_buf,            # (TS, H) VMEM scratch: gathered word rows
                     sem,                 # DMA semaphore
                     *, ts, tiles_per_seq, n_types):
    i = pl.program_id(0)
    base = i * ts

    # ---- 文字的嵌入层: per-row DMA gather from the HBM word table ------------
    # Start every row copy first; the DMAs fly while the position / segment
    # terms below are being computed (self-contained per grid step).
    @pl.loop(0, ts)
    def _start(t):
        row = tok_smem[base + t]
        pltpu.make_async_copy(word_hbm.at[pl.ds(row, 1), :],
                              rows_buf.at[pl.ds(t, 1), :],
                              sem).start()

    # ---- 位置的嵌入层: slice of the VMEM-resident position table ------------
    if tiles_per_seq == 1:
        pos_e = pos_ref[...]                                       # (ts, H)
    else:
        off = pl.multiple_of((i % tiles_per_seq) * ts, ts)
        pos_e = pos_ref[pl.ds(off, ts), :]

    # ---- 片段的嵌入层 ---------------------------------------------------------
    seg = seg_ref[...]                                             # (ts, 1) int32
    st = st_ref[...]                                               # (T, H)
    if n_types == 2:
        # one fused multiply-add instead of per-type where + broadcast
        seg_e = st[0][None, :] + seg.astype(jnp.float32) * (st[1] - st[0])[None, :]
    else:
        oh = (seg == lax.broadcasted_iota(jnp.int32, (ts, n_types), 1)).astype(jnp.float32)
        seg_e = jnp.dot(oh, st, preferred_element_type=jnp.float32)

    partial_e = pos_e + seg_e                                      # (ts, H) f32

    # ---- collect the gathered word rows --------------------------------------
    @pl.loop(0, ts)
    def _wait(t):
        pltpu.make_async_copy(word_hbm.at[pl.ds(0, 1), :],
                              rows_buf.at[pl.ds(t, 1), :],
                              sem).wait()

    x = partial_e + rows_buf[...].astype(jnp.float32)

    # ---- 层归一化: single-pass moments, clamped biased variance --------------
    mean = jnp.mean(x, axis=-1, keepdims=True)
    var = jnp.maximum(jnp.mean(x * x, axis=-1, keepdims=True) - mean * mean, 0.0)
    xn = (x - mean) * lax.rsqrt(var + EPS)
    o_ref[...] = (g_ref[...] * xn + b_ref[...]).astype(o_ref.dtype)


def _pick_token_tile(s_pad, batch, cap=512):
    """Largest TS (multiple of 8, <= cap) such that either TS | S_pad (several
    tiles per sequence) or TS = k*S_pad with k | B (tile spans whole sequences)."""
    best = 8
    ts = 8
    limit = min(s_pad * batch, cap)
    while ts <= limit:
        if s_pad % ts == 0 or (ts % s_pad == 0 and batch % (ts // s_pad) == 0):
            best = ts
        ts += 8
    return best


def input_embedding(token_ids, segment_ids, word_table, seg_table, pos_table,
                    ln_weight, ln_bias, *, ts_cap=512):
    B, S = token_ids.shape
    V, H = word_table.shape
    T = seg_table.shape[0]
    P = pos_table.shape[0]
    assert S <= P, "sequence longer than position table (配置.文字最大量)"

    if segment_ids is None:                      # 记号列表=None -> all sentence-A
        segment_ids = jnp.zeros_like(token_ids)

    # Pad S to a multiple of 8 so flattened (TS, H) blocks satisfy the (8,128)
    # constraint for any S; padding tokens use id 0 (padding_idx) and are
    # sliced off at the end.
    S_pad = ((S + 7) // 8) * 8
    pad = S_pad - S
    tok = token_ids.astype(jnp.int32)
    seg = segment_ids.astype(jnp.int32)
    pos_slab = pos_table[:S].astype(jnp.float32)
    if pad:
        tok = jnp.pad(tok, ((0, 0), (0, pad)))
        seg = jnp.pad(seg, ((0, 0), (0, pad)))
        pos_slab = jnp.pad(pos_slab, ((0, pad), (0, 0)))

    N = B * S_pad
    TS = _pick_token_tile(S_pad, B, ts_cap)
    num_tiles = N // TS
    if TS >= S_pad:                              # tile spans k whole (padded) sequences
        k = TS // S_pad
        pos_arg = jnp.tile(pos_slab, (k, 1)) if k > 1 else pos_slab   # (TS, H)
        tiles_per_seq = 1
    else:                                        # several tiles per sequence
        pos_arg = pos_slab                                            # (S_pad, H)
        tiles_per_seq = S_pad // TS
    pb = pos_arg.shape[0]

    tok_flat = tok.reshape(N)                    # -> SMEM via scalar prefetch
    seg_flat = seg.reshape(N, 1)
    st = seg_table.astype(jnp.float32)
    gamma = ln_weight.astype(jnp.float32).reshape(1, H)
    beta = ln_bias.astype(jnp.float32).reshape(1, H)
    wt = word_table                              # stays in HBM; rows DMA'd on demand

    # Explicit VMEM budget: streamed tiles (double-buffered) + resident tables
    # + gather scratch, plus headroom — stays honest on v7x's 64 MiB/TC.
    w_item = wt.dtype.itemsize
    vmem_needed = (
        TS * H * w_item                          # rows_buf scratch
        + 2 * TS * H * 4                         # output tile (double buffered)
        + 2 * TS * 128 * 4                       # segment-id tile (lane padded)
        + 2 * pb * H * 4                         # resident position rows
        + 2 * T * H * 4 + 4 * H * 4              # segment table + gamma/beta
    )
    vmem_limit = int(min(max(vmem_needed + (8 << 20), 16 << 20), 64 << 20))

    kernel = functools.partial(_embed_ln_kernel, ts=TS,
                               tiles_per_seq=tiles_per_seq, n_types=T)

    # NOTE: for the demo H=32 the output last dim < 128, so stores are masked;
    # production H >= 128 (e.g. 768) gives lane-dense unmasked stores.
    out = pl.pallas_call(
        kernel,
        out_shape=jax.ShapeDtypeStruct((N, H), jnp.float32),
        grid_spec=pltpu.PrefetchScalarGridSpec(
            num_scalar_prefetch=1,               # token ids -> SMEM
            grid=(num_tiles,),
            in_specs=[
                pl.BlockSpec((TS, 1), lambda i, tok: (i, 0)),   # segment-id tile
                pl.BlockSpec(memory_space=pl.ANY),              # word table (HBM)
                pl.BlockSpec((pb, H), lambda i, tok: (0, 0)),   # position rows (resident)
                pl.BlockSpec((T, H), lambda i, tok: (0, 0)),    # segment table (resident)
                pl.BlockSpec((1, H), lambda i, tok: (0, 0)),    # LN weight (resident)
                pl.BlockSpec((1, H), lambda i, tok: (0, 0)),    # LN bias (resident)
            ],
            out_specs=pl.BlockSpec((TS, H), lambda i, tok: (i, 0)),
            scratch_shapes=[
                pltpu.VMEM((TS, H), wt.dtype),   # gathered word rows
                pltpu.SemaphoreType.DMA(()),     # shared by the per-row copies
            ],
        ),
        compiler_params=pltpu.CompilerParams(
            dimension_semantics=("parallel",),   # independent tiles -> both TCs on v7x
            vmem_limit_bytes=vmem_limit,
        ),
    )(tok_flat, seg_flat, wt, pos_arg, st, gamma, beta)

    out = out.reshape(B, S_pad, H)
    return out[:, :S, :] if pad else out


def _reference(token_ids, segment_ids, word_table, seg_table, pos_table,
               ln_weight, ln_bias):
    S = token_ids.shape[1]
    pos_ids = jnp.arange(S, dtype=jnp.int32)
    x = (word_table[token_ids]
         + pos_table[pos_ids][None, :, :]
         + seg_table[segment_ids])
    mu = x.mean(-1, keepdims=True)
    var = ((x - mu) ** 2).mean(-1, keepdims=True)
    x = (x - mu) / jnp.sqrt(var + EPS)
    return ln_weight * x + ln_bias


if __name__ == "__main__":
    # Small config consistent with the module's __init__:
    #   配置.文字类型数 (vocab)   = 64
    #   配置.句子类型数 (types)   = 2
    #   配置.文字最大量 (max pos) = 16
    #   配置.隐藏层大小 (hidden)  = 32
    VOCAB, NTYPE, MAXPOS, H = 64, 2, 16, 32
    B, S = 2, 8

    key = jax.random.PRNGKey(0)
    k_w, k_s, k_p, k_tok = jax.random.split(key, 4)

    word_table = jax.random.normal(k_w, (VOCAB, H), dtype=jnp.float32) * 0.02
    # padding_idx=0: row 0 is zero, matching nn.Embedding(padding_idx=0)
    word_table = word_table.at[0].set(0.0)
    seg_table = jax.random.normal(k_s, (NTYPE, H), dtype=jnp.float32) * 0.02
    pos_table = jax.random.normal(k_p, (MAXPOS, H), dtype=jnp.float32) * 0.02
    ln_weight = jnp.ones((H,), dtype=jnp.float32)   # 层归一化.weight
    ln_bias = jnp.zeros((H,), dtype=jnp.float32)    # 层归一化.bias

    token_ids = jax.random.randint(k_tok, (B, S), 0, VOCAB, dtype=jnp.int32)
    # 记号列表: first half sentence A (0), second half sentence B (1)
    segment_ids = jnp.concatenate(
        [jnp.zeros((B, S // 2), jnp.int32), jnp.ones((B, S - S // 2), jnp.int32)],
        axis=1)

    out = input_embedding(token_ids, segment_ids, word_table, seg_table, pos_table,
                          ln_weight, ln_bias)
    out = jax.block_until_ready(out)

    ref = _reference(token_ids, segment_ids, word_table, seg_table, pos_table,
                     ln_weight, ln_bias)
    assert out.shape == (B, S, H) and out.dtype == jnp.float32
    assert jnp.allclose(out, ref, atol=1e-5, rtol=1e-5), "mismatch vs reference"

    print("KERNEL_OK")
</pallas_src>

<mosaic_0001>
module attributes {stable_mosaic.version = 11 : i64} {
  func.func @_embed_ln_kernel(%arg0: i32, %arg1: memref<16xi32, #tpu.memory_space<smem>>, %arg2: memref<16x1xi32, #tpu.memory_space<vmem>>, %arg3: memref<64x32xf32, #tpu.memory_space<any>>, %arg4: memref<16x32xf32, #tpu.memory_space<vmem>>, %arg5: memref<2x32xf32, #tpu.memory_space<vmem>>, %arg6: memref<1x32xf32, #tpu.memory_space<vmem>>, %arg7: memref<1x32xf32, #tpu.memory_space<vmem>>, %arg8: memref<16x32xf32, #tpu.memory_space<vmem>>, %arg9: memref<16x32xf32, #tpu.memory_space<vmem>>, %arg10: memref<!tpu.dma_semaphore, #tpu.memory_space<semaphore_mem>>) attributes {dimension_semantics = [#tpu.dimension_semantics<parallel>], iteration_bounds = array<i64: 1>, scalar_prefetch = 1 : i64, scratch_operands = 2 : i64, tpu.core_type = #tpu.core_type<tc>, window_params = [{transform_indices = @transform_0, window_bounds = array<i64: 16, 1>}, {}, {pipeline_mode = #tpu.pipeline_mode<synchronous>, transform_indices = @transform_2, window_bounds = array<i64: 16, 32>}, {pipeline_mode = #tpu.pipeline_mode<synchronous>, transform_indices = @transform_3, window_bounds = array<i64: 2, 32>}, {pipeline_mode = #tpu.pipeline_mode<synchronous>, transform_indices = @transform_4, window_bounds = array<i64: 1, 32>}, {pipeline_mode = #tpu.pipeline_mode<synchronous>, transform_indices = @transform_5, window_bounds = array<i64: 1, 32>}, {transform_indices = @transform_6, window_bounds = array<i64: 16, 32>}]} {
    %c16_i32 = arith.constant 16 : i32
    %0 = arith.muli %arg0, %c16_i32 : i32
    %c0_i32 = arith.constant 0 : i32
    %c16_i32_0 = arith.constant 16 : i32
    %1 = arith.addi %c0_i32, %c16_i32_0 : i32
    %c1_i32 = arith.constant 1 : i32
    scf.for %arg11 = %c0_i32 to %1 step %c1_i32  : i32 {
      %c1_i32_24 = arith.constant 1 : i32
      %51 = arith.muli %arg11, %c1_i32_24 : i32
      %c0_i32_25 = arith.constant 0 : i32
      %52 = arith.addi %c0_i32_25, %51 : i32
      %53 = arith.addi %0, %52 : i32
      %54 = arith.index_cast %53 : i32 to index
      %55 = memref.load %arg1[%54] : memref<16xi32, #tpu.memory_space<smem>>
      %c0_i32_26 = arith.constant 0 : i32
      %56 = tpu.memref_slice %arg3[%55, %c0_i32_26] : memref<64x32xf32, #tpu.memory_space<any>> -> memref<1x32xf32, #tpu.memory_space<any>>
      %c0_i32_27 = arith.constant 0 : i32
      %57 = tpu.memref_slice %arg9[%52, %c0_i32_27] : memref<16x32xf32, #tpu.memory_space<vmem>> -> memref<1x32xf32, #tpu.memory_space<vmem>>
      tpu.enqueue_dma source(%56 : memref<1x32xf32, #tpu.memory_space<any>>) target(%57 : memref<1x32xf32, #tpu.memory_space<vmem>>) target_semaphore(%arg10 : memref<!tpu.dma_semaphore, #tpu.memory_space<semaphore_mem>>)
    }
    %c16_i32_1 = arith.constant 16 : i32
    %c0 = arith.constant 0 : index
    %c0_2 = arith.constant 0 : index
    %2 = vector.load %arg4[%c0, %c0_2] : memref<16x32xf32, #tpu.memory_space<vmem>>, vector<16x32xf32>
    %c0_3 = arith.constant 0 : index
    %c0_4 = arith.constant 0 : index
    %3 = vector.load %arg2[%c0_3, %c0_4] : memref<16x1xi32, #tpu.memory_space<vmem>>, vector<16x1xi32>
    %c0_5 = arith.constant 0 : index
    %c0_6 = arith.constant 0 : index
    %4 = vector.load %arg5[%c0_5, %c0_6] : memref<2x32xf32, #tpu.memory_space<vmem>>, vector<2x32xf32>
    %5 = vector.extract_strided_slice %4 {offsets = [0, 0], sizes = [1, 32], strides = [1, 1]} : vector<2x32xf32> to vector<1x32xf32>
    %6 = vector.shape_cast %5 : vector<1x32xf32> to vector<32xf32>
    %7 = vector.shape_cast %6 : vector<32xf32> to vector<1x32xf32>
    %8 = arith.sitofp %3 : vector<16x1xi32> to vector<16x1xf32>
    %9 = vector.extract_strided_slice %4 {offsets = [1, 0], sizes = [1, 32], strides = [1, 1]} : vector<2x32xf32> to vector<1x32xf32>
    %10 = vector.shape_cast %9 : vector<1x32xf32> to vector<32xf32>
    %11 = vector.extract_strided_slice %4 {offsets = [0, 0], sizes = [1, 32], strides = [1, 1]} : vector<2x32xf32> to vector<1x32xf32>
    %12 = vector.shape_cast %11 : vector<1x32xf32> to vector<32xf32>
    %13 = arith.subf %10, %12 : vector<32xf32>
    %14 = vector.shape_cast %13 : vector<32xf32> to vector<1x32xf32>
    %15 = vector.broadcast %8 : vector<16x1xf32> to vector<16x32xf32>
    %16 = vector.broadcast %14 : vector<1x32xf32> to vector<16x32xf32>
    %17 = arith.mulf %15, %16 : vector<16x32xf32>
    %18 = vector.broadcast %7 : vector<1x32xf32> to vector<16x32xf32>
    %19 = arith.addf %18, %17 : vector<16x32xf32>
    %20 = arith.addf %2, %19 : vector<16x32xf32>
    %c0_i32_7 = arith.constant 0 : i32
    %c16_i32_8 = arith.constant 16 : i32
    %21 = arith.addi %c0_i32_7, %c16_i32_8 : i32
    %c1_i32_9 = arith.constant 1 : i32
    scf.for %arg11 = %c0_i32_7 to %21 step %c1_i32_9  : i32 {
      %c1_i32_24 = arith.constant 1 : i32
      %51 = arith.muli %arg11, %c1_i32_24 : i32
      %c0_i32_25 = arith.constant 0 : i32
      %52 = arith.addi %c0_i32_25, %51 : i32
      %c0_i32_26 = arith.constant 0 : i32
      %c0_i32_27 = arith.constant 0 : i32
      %53 = tpu.memref_slice %arg3[%c0_i32_26, %c0_i32_27] : memref<64x32xf32, #tpu.memory_space<any>> -> memref<1x32xf32, #tpu.memory_space<any>>
      %c0_i32_28 = arith.constant 0 : i32
      %54 = tpu.memref_slice %arg9[%52, %c0_i32_28] : memref<16x32xf32, #tpu.memory_space<vmem>> -> memref<1x32xf32, #tpu.memory_space<vmem>>
      tpu.wait_dma2 semaphore(%arg10 : memref<!tpu.dma_semaphore, #tpu.memory_space<semaphore_mem>>) src(%53 : memref<1x32xf32, #tpu.memory_space<any>>) dst(%54 : memref<1x32xf32, #tpu.memory_space<vmem>>)
    }
    %c16_i32_10 = arith.constant 16 : i32
    %c0_11 = arith.constant 0 : index
    %c0_12 = arith.constant 0 : index
    %22 = vector.load %arg9[%c0_11, %c0_12] : memref<16x32xf32, #tpu.memory_space<vmem>>, vector<16x32xf32>
    %23 = arith.addf %20, %22 : vector<16x32xf32>
    %cst = arith.constant dense<0.000000e+00> : vector<16xf32>
    %24 = vector.multi_reduction <add>, %23, %cst [1] : vector<16x32xf32> to vector<16xf32>
    %25 = vector.shape_cast %24 : vector<16xf32> to vector<16x1xf32>
    %cst_13 = arith.constant 3.200000e+01 : f32
    %26 = vector.broadcast %cst_13 : f32 to vector<16x1xf32>
    %27 = arith.divf %25, %26 : vector<16x1xf32>
    %28 = arith.mulf %23, %23 : vector<16x32xf32>
    %cst_14 = arith.constant dense<0.000000e+00> : vector<16xf32>
    %29 = vector.multi_reduction <add>, %28, %cst_14 [1] : vector<16x32xf32> to vector<16xf32>
    %30 = vector.shape_cast %29 : vector<16xf32> to vector<16x1xf32>
    %cst_15 = arith.constant 3.200000e+01 : f32
    %31 = vector.broadcast %cst_15 : f32 to vector<16x1xf32>
    %32 = arith.divf %30, %31 : vector<16x1xf32>
    %33 = arith.mulf %27, %27 : vector<16x1xf32>
    %34 = arith.subf %32, %33 : vector<16x1xf32>
    %cst_16 = arith.constant 0.000000e+00 : f32
    %35 = vector.broadcast %cst_16 : f32 to vector<16x1xf32>
    %36 = arith.maximumf %34, %35 : vector<16x1xf32>
    %37 = vector.broadcast %27 : vector<16x1xf32> to vector<16x32xf32>
    %38 = arith.subf %23, %37 : vector<16x32xf32>
    %cst_17 = arith.constant 9.99999996E-13 : f32
    %39 = vector.broadcast %cst_17 : f32 to vector<16x1xf32>
    %40 = arith.addf %36, %39 : vector<16x1xf32>
    %41 = math.rsqrt %40 : vector<16x1xf32>
    %42 = vector.broadcast %41 : vector<16x1xf32> to vector<16x32xf32>
    %43 = arith.mulf %38, %42 : vector<16x32xf32>
    %c0_18 = arith.constant 0 : index
    %c0_19 = arith.constant 0 : index
    %44 = vector.load %arg6[%c0_18, %c0_19] : memref<1x32xf32, #tpu.memory_space<vmem>>, vector<1x32xf32>
    %45 = vector.broadcast %44 : vector<1x32xf32> to vector<16x32xf32>
    %46 = arith.mulf %45, %43 : vector<16x32xf32>
    %c0_20 = arith.constant 0 : index
    %c0_21 = arith.constant 0 : index
    %47 = vector.load %arg7[%c0_20, %c0_21] : memref<1x32xf32, #tpu.memory_space<vmem>>, vector<1x32xf32>
    %48 = vector.broadcast %47 : vector<1x32xf32> to vector<16x32xf32>
    %49 = arith.addf %46, %48 : vector<16x32xf32>
    %c0_22 = arith.constant 0 : index
    %c0_23 = arith.constant 0 : index
    %50 = vector.load %arg8[%c0_22, %c0_23] : memref<16x32xf32, #tpu.memory_space<vmem>>, vector<16x32xf32>
    tpu.vector_store %arg8[%c0_22, %c0_23], %49 {strides = array<i32>} : memref<16x32xf32, #tpu.memory_space<vmem>>, vector<16x32xf32>,
    return
  }
  func.func @transform_0(%arg0: i32, %arg1: memref<16xi32, #tpu.memory_space<smem>>) -> (i32, i32) {
    %c0_i32 = arith.constant 0 : i32
    %c0_i32_0 = arith.constant 0 : i32
    return %arg0, %c0_i32 : i32, i32
  }
  func.func @transform_2(%arg0: i32, %arg1: memref<16xi32, #tpu.memory_space<smem>>) -> (i32, i32) {
    %c0_i32 = arith.constant 0 : i32
    %c0_i32_0 = arith.constant 0 : i32
    %c0_i32_1 = arith.constant 0 : i32
    return %c0_i32, %c0_i32_0 : i32, i32
  }
  func.func @transform_3(%arg0: i32, %arg1: memref<16xi32, #tpu.memory_space<smem>>) -> (i32, i32) {
    %c0_i32 = arith.constant 0 : i32
    %c0_i32_0 = arith.constant 0 : i32
    %c0_i32_1 = arith.constant 0 : i32
    return %c0_i32, %c0_i32_0 : i32, i32
  }
  func.func @transform_4(%arg0: i32, %arg1: memref<16xi32, #tpu.memory_space<smem>>) -> (i32, i32) {
    %c0_i32 = arith.constant 0 : i32
    %c0_i32_0 = arith.constant 0 : i32
    %c0_i32_1 = arith.constant 0 : i32
    return %c0_i32, %c0_i32_0 : i32, i32
  }
  func.func @transform_5(%arg0: i32, %arg1: memref<16xi32, #tpu.memory_space<smem>>) -> (i32, i32) {
    %c0_i32 = arith.constant 0 : i32
    %c0_i32_0 = arith.constant 0 : i32
    %c0_i32_1 = arith.constant 0 : i32
    return %c0_i32, %c0_i32_0 : i32, i32
  }
  func.func @transform_6(%arg0: i32, %arg1: memref<16xi32, #tpu.memory_space<smem>>) -> (i32, i32) {
    %c0_i32 = arith.constant 0 : i32
    %c0_i32_0 = arith.constant 0 : i32
    return %arg0, %c0_i32 : i32, i32
  }
}

</mosaic_0001>

<llo_original>
// kernel: tpu_custom_call.1
$region0: #{tpu_custom_call.1}
  #allocation0 [shape = 'u32[]', space=smem, size = 0x4, offset = 0x4, fixed_abs, tag = 'smem constant byte address 0x4 - core index']
  #allocation1 [shape = 'u32[144,128]{1,0:T(1,128)}', space=vmem, size = 0x12000, scoped, tag = 'internal scratch']
  #allocation2 [shape = 'f32[16,32]{1,0:T(8,128)}', space=vmem, size = 0x2000, scoped, tag = 'scratch operand']
  #allocation3 [shape = 's32[1]{0}', space=sflag, size = 0x4, scoped, tag = 'scratch operand']
  #allocation4 [shape = 's32[1]{0}', space=sflag, size = 0x4, scoped, tag = 'scoped memory for tpu_custom_call.1']
  #allocation5 [shape = 'u8[512]{0}', space=smem, size = 0x200, scoped, tag = 'prefetched SMEM operand 0']
  #allocation8 [shape = 's32[]', space=sflag, size = 0x4, offset = 0, fixed_abs, tag = 'sflag constant byte address 0x0 - dummy sync flag']
  %s0 = inlined_call_operand.vmem [shape: s32[16], index: 0, kind: input, shape index: {}]
  %s1 = inlined_call_operand.vmem [shape: s32[16,1], index: 1, kind: input, shape index: {}]
  %s2 = inlined_call_operand.vmem [shape: f32[64,32], index: 2, kind: input, shape index: {}]
  %s3 = inlined_call_operand.vmem [shape: f32[16,32], index: 3, kind: input, shape index: {}]
  %s4 = inlined_call_operand.vmem [shape: f32[2,32], index: 4, kind: input, shape index: {}]
  %s5 = inlined_call_operand.vmem [shape: f32[1,32], index: 5, kind: input, shape index: {}]
  %s6 = inlined_call_operand.vmem [shape: f32[1,32], index: 6, kind: input, shape index: {}]
  %s7 = inlined_call_operand.hbm [shape: f32[16,32], index: 7, kind: output, shape index: {}]
  %s8 = sld [smem:[#allocation0]]
  $region74: #{tpu_custom_call.1} parent=0
    _
  %s10 = ssub.s32 1, %s8
  %s11 = scalar_select 0, %s10, %s8
  %s12 = sshll.u32 %s0, 4
  %s13 = int_to_ptr.vmem [resolvable:$true] %s12
  %15 = dma.vmem_to_smem %s13, 16, [#allocation5], [#allocation4]
  %16 = dma.done [#allocation4], 16
  %17 = sfence
  $region1: #{tpu_custom_call.1} parent=0
    #allocation6 [shape = 'u8[8192]{0}', space=vmem, size = 0x2000, scoped, tag = 'output window, operand 0, single buffered']
    #allocation7 [shape = 's32[1]{0}', space=sflag, size = 0x4, scoped, tag = 'scoped memory for tpu_custom_call.1']
    %18 = vsyncpa [#allocation7], 0
    // Predicated region
    $region2: #{tpu_custom_call.1} parent=1 // pred_check
      _
    $region3: #{tpu_custom_call.1} parent=1 // pred_check_branch
      %20 = sbr.rel (0) target = $region5
    $region4: #{tpu_custom_call.1} parent=1 // pred_region
      _
    $region5: #{tpu_custom_call.1} parent=1 // pred_fallthru
      _
    // Predicated region
    $region6: #{tpu_custom_call.1} parent=1 // pred_check
      _
    $region7: #{tpu_custom_call.1} parent=1 // pred_check_branch
      %22 = sbr.rel (0) target = $region9
    $region8: #{tpu_custom_call.1} parent=1 // pred_region
      _
    $region9: #{tpu_custom_call.1} parent=1 // pred_fallthru
      _
    // Predicated region
    $region10: #{tpu_custom_call.1} parent=1 // pred_check
      _
    $region11: #{tpu_custom_call.1} parent=1 // pred_check_branch
      %24 = sbr.rel (0) target = $region13
    $region12: #{tpu_custom_call.1} parent=1 // pred_region
      _
    $region13: #{tpu_custom_call.1} parent=1 // pred_fallthru
      _
    // Predicated region
    $region14: #{tpu_custom_call.1} parent=1 // pred_check
      _
    $region15: #{tpu_custom_call.1} parent=1 // pred_check_branch
      %26 = sbr.rel (0) target = $region17
    $region16: #{tpu_custom_call.1} parent=1 // pred_region
      _
    $region17: #{tpu_custom_call.1} parent=1 // pred_fallthru
      _
    // Predicated region
    $region18: #{tpu_custom_call.1} parent=1 // pred_check
      _
    $region19: #{tpu_custom_call.1} parent=1 // pred_check_branch
      %28 = sbr.rel (0) target = $region21
    $region20: #{tpu_custom_call.1} parent=1 // pred_region
      _
    $region21: #{tpu_custom_call.1} parent=1 // pred_fallthru
      _
    %s29 = smul.u32 0, 16
    loop: start=0, step=1, limit=16
    $region22: #{tpu_custom_call.1} parent=1 // loop_pre_header
      _
    $region23: #{tpu_custom_call.1} parent=1 // loop_header
      %s31 = sphi 0, %s35
      %p32 = scmp.ge.s32.totalorder %s31, 16
    $region24: #{tpu_custom_call.1} parent=1 // loop_header_branch
      %34 = sbr.rel (%p32) target = $region28
    $region25: #{tpu_custom_call.1} parent=1 // loop_body
      %s36 = sadd.s32 %s29, %s31
      %s37 = sld [smem:[#allocation5 + %s36]]
      %s38 = scalar_lea.vmem %s2, %s37
      %s39 = scalar_lea.vmem [#allocation2], %s31
      %p41 = scmp.lt.u32.totalorder 1, 8
      %p42 = pneg %p41
      // Predicated region
      $region29: #{tpu_custom_call.1} parent=25 // pred_check
        _
      $region30: #{tpu_custom_call.1} parent=25 // pred_check_branch
        %44 = sbr.rel (%p41) target = $region32
      $region31: #{tpu_custom_call.1} parent=25 // pred_region
        %s59 = sand.u32 1, 7
        %p60 = scmp.eq.s32.totalorder %s59, 0
        %p61 = pneg %p60
        // Predicated region
        $region44: #{tpu_custom_call.1} parent=31 // pred_check
          _
        $region45: #{tpu_custom_call.1} parent=31 // pred_check_branch
          %63 = sbr.rel (%p60) target = $region47
        $region46: #{tpu_custom_call.1} parent=31 // pred_region
          %s64 = sand.u32 1, 7
          %s65 = ssub.s32 1, %s64
          %s66 = scalar_lea.vmem %s38, %s65
          %s67 = ssub.s32 1, %s64
          %s68 = scalar_lea.vmem %s39, %s67 [#allocation2]
          %s69 = sshllo.u32 0, %s64
          loop: start=0, step=1, limit=1
          $region48: #{tpu_custom_call.1} parent=46 // loop_pre_header
            _
          $region49: #{tpu_custom_call.1} parent=46 // loop_header
            %s71 = sphi 0, %s75
            %p72 = scmp.ge.s32.totalorder %s71, 1
            %s76 = sphi %s66, %s66
            %s77 = sphi %s68, %s68
          $region50: #{tpu_custom_call.1} parent=46 // loop_header_branch
            %74 = sbr.rel (%p72) target = $region54
          $region51: #{tpu_custom_call.1} parent=46 // loop_body
            %v78 = vld [vmem:[%s76] sm:%s69]
            %79 = vst [vmem:[%s77] sm:%s69] %v78
          $region52: #{tpu_custom_call.1} parent=46 // loop_footer
            %s75 = sadd.s32 1, %s71
          $region53: #{tpu_custom_call.1} parent=46 // loop_footer_branch
            %70 = sbr.rel target = $region49
          $region54: #{tpu_custom_call.1} parent=46 // loop_exit
            _
        $region47: #{tpu_custom_call.1} parent=31 // pred_fallthru
          _
      $region32: #{tpu_custom_call.1} parent=25 // pred_fallthru
        _
      // Predicated region
      $region33: #{tpu_custom_call.1} parent=25 // pred_check
        %p45 = pneg %p41
      $region34: #{tpu_custom_call.1} parent=25 // pred_check_branch
        %47 = sbr.rel (%p45) target = $region36
      $region35: #{tpu_custom_call.1} parent=25 // pred_region
        %s48 = sshllo.u32 0, 1
        loop: start=0, step=1, limit=1
        $region37: #{tpu_custom_call.1} parent=35 // loop_pre_header
          _
        $region38: #{tpu_custom_call.1} parent=35 // loop_header
          %s50 = sphi 0, %s54
          %p51 = scmp.ge.s32.totalorder %s50, 1
          %s55 = sphi %s38, %s38
          %s56 = sphi %s39, %s39
        $region39: #{tpu_custom_call.1} parent=35 // loop_header_branch
          %53 = sbr.rel (%p51) target = $region43
        $region40: #{tpu_custom_call.1} parent=35 // loop_body
          %v57 = vld [vmem:[%s55] sm:%s48]
          %58 = vst [vmem:[%s56] sm:%s48] %v57
        $region41: #{tpu_custom_call.1} parent=35 // loop_footer
          %s54 = sadd.s32 1, %s50
        $region42: #{tpu_custom_call.1} parent=35 // loop_footer_branch
          %49 = sbr.rel target = $region38
        $region43: #{tpu_custom_call.1} parent=35 // loop_exit
          _
      $region36: #{tpu_custom_call.1} parent=25 // pred_fallthru
        _
      // Predicated region
      $region55: #{tpu_custom_call.1} parent=25 // pred_check
        _
      $region56: #{tpu_custom_call.1} parent=25 // pred_check_branch
        %82 = sbr.rel (0) target = $region58
      $region57: #{tpu_custom_call.1} parent=25 // pred_region
        %83 = vsyncadd [#allocation3], 16
      $region58: #{tpu_custom_call.1} parent=25 // pred_fallthru
        _
    $region26: #{tpu_custom_call.1} parent=1 // loop_footer
      %s35 = sadd.s32 1, %s31
    $region27: #{tpu_custom_call.1} parent=1 // loop_footer_branch
      %30 = sbr.rel target = $region23
    $region28: #{tpu_custom_call.1} parent=1 // loop_exit
      _
    %v84 = vld [vmem:[%s3] sm:$0xff]
    %v85 = vld [vmem:[%s3 + $0x8] sm:$0xff]
    %v86 = vld [vmem:[%s1] sm:$0xff]
    %v87 = vld [vmem:[%s1 + $0x8] sm:$0xff]
    %v88 = vld [vmem:[%s4] sm:$0x3]
    %v89 = vcvt.s32.f32 %v86
    %v90 = vcvt.s32.f32 %v87
    %v92 = vrot.slane %v88, 7
    %v94 = vsub.f32 %v88, %v92
    %96 = vset.pattern.permute.xlu0 0
    %97 = vperm.xlu0 %96, %v89
    %v98 = vpop.permute.xlu0 %97
    %101 = vset.pattern.permute.xlu0 0
    %102 = vperm.xlu0 %101, %v90
    %v103 = vpop.permute.xlu0 %102
    %v105 = vlaneseq
    %v106 = vshrl.u32 %v105, 7
    %v107 = vsub.s32 1, %v106
    %v108 = vrot.slane %v94, %v107
    %v109 = vmul.f32 %v98, %v108
    %v110 = vmul.f32 %v103, %v108
    %v111 = vlaneseq
    %v112 = vshrl.u32 %v111, 7
    %v113 = vsub.s32 0, %v112
    %v114 = vrot.slane %v88, %v113
    %v115 = vadd.f32 %v114, %v109
    %v116 = vadd.f32 %v114, %v110
    %v117 = vadd.f32 %v84, %v115
    %v118 = vadd.f32 %v85, %v116
    loop: start=0, step=1, limit=16
    $region59: #{tpu_custom_call.1} parent=1 // loop_pre_header
      _
    $region60: #{tpu_custom_call.1} parent=1 // loop_header
      %s120 = sphi 0, %s124
      %p121 = scmp.ge.s32.totalorder %s120, 16
    $region61: #{tpu_custom_call.1} parent=1 // loop_header_branch
      %123 = sbr.rel (%p121) target = $region65
    $region62: #{tpu_custom_call.1} parent=1 // loop_body
      %s125 = smul.u32 1, 1
      %s126 = sshll.u32 %s125, 4
      %127 = dma.done [#allocation3], %s126
    $region63: #{tpu_custom_call.1} parent=1 // loop_footer
      %s124 = sadd.s32 1, %s120
    $region64: #{tpu_custom_call.1} parent=1 // loop_footer_branch
      %119 = sbr.rel target = $region60
    $region65: #{tpu_custom_call.1} parent=1 // loop_exit
      _
    %v128 = vld [vmem:[#allocation2] sm:$0xff]
    %v129 = vld [vmem:[#allocation2 + $0x8] sm:$0xff]
    %v130 = vadd.f32 %v117, %v128
    %v131 = vadd.f32 %v118, %v129
    %vm132 = vcmask 261120
    %v133 = vsel %vm132, %v130, 0.0
    %134 = vadd.xlane.f32.xlu0 %v133
    %v135 = vpop.xlane.xlu0 %134
    %v136 = vsel %vm132, %v131, 0.0
    %137 = vadd.xlane.f32.xlu0 %v136
    %v138 = vpop.xlane.xlu0 %137
    %v139 = vrcp.pop 32.0
    %v140 = vmul.f32 %v135, %v139
    %v141 = vmul.f32 %v138, %v139
    %v142 = vmul.f32 %v130, %v130
    %v143 = vmul.f32 %v131, %v131
    %v144 = vsel %vm132, %v142, 0.0
    %145 = vadd.xlane.f32.xlu0 %v144
    %v146 = vpop.xlane.xlu0 %145
    %v147 = vsel %vm132, %v143, 0.0
    %148 = vadd.xlane.f32.xlu0 %v147
    %v149 = vpop.xlane.xlu0 %148
    %v150 = vmul.f32 %v146, %v139
    %v151 = vmul.f32 %v149, %v139
    %v152 = vmul.f32 %v140, %v140
    %v153 = vmul.f32 %v141, %v141
    %v154 = vsub.f32 %v150, %v152
    %v155 = vsub.f32 %v151, %v153
    %v156 = vmax.f32 %v154, 0.0
    %v157 = vmax.f32 %v155, 0.0
    %v158 = vsub.f32 %v130, %v140
    %v159 = vsub.f32 %v131, %v141
    %v160 = vadd.f32 %v156, 1e-12
    %v161 = vadd.f32 %v157, 1e-12
    %v162 = vrsqrt.pop %v160
    %v163 = vrsqrt.pop %v161
    %v164 = vmul.f32 %v158, %v162
    %v165 = vmul.f32 %v159, %v163
    %v166 = vld [vmem:[%s5] sm:$0x1]
    %v168 = vlaneseq
    %v169 = vshrl.u32 %v168, 7
    %v170 = vsub.s32 0, %v169
    %v171 = vrot.slane %v166, %v170
    %v173 = vmul.f32 %v171, %v164
    %v174 = vmul.f32 %v171, %v165
    %v175 = vld [vmem:[%s6] sm:$0x1]
    %v177 = vlaneseq
    %v178 = vshrl.u32 %v177, 7
    %v179 = vsub.s32 0, %v178
    %v180 = vrot.slane %v175, %v179
    %v182 = vadd.f32 %v173, %v180
    %v183 = vadd.f32 %v174, %v180
    %184 = vst.msk [vmem:[#allocation6] sm:$0xff] %vm132, %v182
    %185 = vst.msk [vmem:[#allocation6 + $0x8] sm:$0xff] %vm132, %v183
    // Predicated region
    $region66: #{tpu_custom_call.1} parent=1 // pred_check
      _
    $region67: #{tpu_custom_call.1} parent=1 // pred_check_branch
      %187 = sbr.rel (0) target = $region69
    $region68: #{tpu_custom_call.1} parent=1 // pred_region
      %s189 = ssub.s32 256, 256
      %190 = vsyncadd [#allocation7], %s189
      %s191 = sshll.u32 [#allocation6], 4
      %s192 = int_to_ptr.vmem [resolvable:$true] %s191
      %197 = dma.vmem_to_hbm [thread:$0]  %s192, 256, %s7, [#allocation7], 128, 128, 8
    $region69: #{tpu_custom_call.1} parent=1 // pred_fallthru
      _
    // Predicated region
    $region70: #{tpu_custom_call.1} parent=1 // pred_check
      _
    $region71: #{tpu_custom_call.1} parent=1 // pred_check_branch
      %199 = sbr.rel (0) target = $region73
    $region72: #{tpu_custom_call.1} parent=1 // pred_region
      %200 = dma.done [#allocation7], 256
    $region73: #{tpu_custom_call.1} parent=1 // pred_fallthru
      _
    %201 = vsyncpa [#allocation7], 1
  %202 = vsyncmov [#allocation3]
  %s203 = vpop.sfrf %202
  %p204 = scmp.eq.s32.totalorder %s203, 0
  %p205 = pneg %p204
  %207 = shalt.err (%p205)

</llo_original>
